<compile_context>
chip_gen: v6e
topology: v6e:2x2x1
jax: 0.10.0
libtpu: 0.0.40
codegen_flags: <defaults>
</compile_context>

<pallas_src>
import jax
import jax.numpy as jnp
from jax.experimental import pallas as pl
from jax.experimental.pallas import tpu as pltpu


# ---------------------------------------------------------------------------
# Kernel: 4 fused Linear layers (BN already folded into w2/b2 and w3/b3).
# ---------------------------------------------------------------------------
def mlp_kernel(x_ref,
               w1_ref, b1_ref,
               w2_ref, b2_ref,
               w3_ref, b3_ref,
               w4_ref, b4_ref,
               out_ref):
    # x arrives raw f32 straight from HBM; cast to bf16 in-register.
    x = x_ref[...].astype(jnp.bfloat16)

    # Layer 1: Linear + ReLU   (bf16 x bf16 -> f32 accumulate on MXU, ragged K ok)
    h = jnp.dot(x, w1_ref[...], preferred_element_type=jnp.float32)
    h = jnp.maximum(h + b1_ref[...], 0.0).astype(jnp.bfloat16)

    # Layer 2: Linear (BN1 folded in) + ReLU
    h = jnp.dot(h, w2_ref[...], preferred_element_type=jnp.float32)
    h = jnp.maximum(h + b2_ref[...], 0.0).astype(jnp.bfloat16)

    # Layer 3: Linear (BN2 folded in, out zero-padded 64->128) + ReLU
    h = jnp.dot(h, w3_ref[...], preferred_element_type=jnp.float32)
    h = jnp.maximum(h + b3_ref[...], 0.0).astype(jnp.bfloat16)

    # Layer 4: Linear -> padded logits (first 2 lanes valid), cast to out dtype
    out = jnp.dot(h, w4_ref[...], preferred_element_type=jnp.float32) + b4_ref[...]
    out_ref[...] = out.astype(out_ref.dtype)


# ---------------------------------------------------------------------------
# Param prep glue: fold eval-mode BN into next layer, pad ragged lane dims, bf16.
# ---------------------------------------------------------------------------
def fold_and_pack(p):
    # Fold BN1 (scale s1, shift t1) into layer 2:
    #   (relu1 * s1 + t1) @ w2 + b2 == relu1 @ (s1.T * w2) + (t1 @ w2 + b2)
    w2f = p["w2"] * p["bn1_scale"].T
    b2f = p["bn1_shift"] @ p["w2"] + p["b2"]

    # Fold BN2 into layer 3.
    w3f = p["w3"] * p["bn2_scale"].T
    b3f = p["bn2_shift"] @ p["w3"] + p["b3"]

    # Pad layer-3 output 64 -> 128 (zero cols, zero bias -> ReLU(0)=0).
    h3, n_out = p["w4"].shape                                    # (64, 2)
    w3p = jnp.pad(w3f, ((0, 0), (0, 128 - h3)))
    b3p = jnp.pad(b3f, ((0, 0), (0, 128 - h3)))

    # Pad layer-4 to (128, 128); padded rows/cols are zero.
    w4p = jnp.pad(p["w4"], ((0, 128 - h3), (0, 128 - n_out)))
    b4p = jnp.pad(p["b4"], ((0, 0), (0, 128 - n_out)))

    bf = lambda a: a.astype(jnp.bfloat16)
    return {
        "w1": bf(p["w1"]), "b1": p["b1"],          # w1 kept at (F, 256), F ragged
        "w2": bf(w2f), "b2": b2f,
        "w3": bf(w3p), "b3": b3p,
        "w4": bf(w4p), "b4": b4p,
        "n_out": int(n_out),
    }


def _round_up(a, m):
    return ((a + m - 1) // m) * m


# ---------------------------------------------------------------------------
# Wrapper.
# ---------------------------------------------------------------------------
def mlp_classifier_forward(x, kp, *, single_call_max_b=256, max_tile=1024):
    """x: (B, F) float32.  Returns logits (B, 2) float32."""
    B, F = x.shape
    n_out = kp["n_out"]

    weights = (kp["w1"], kp["b1"], kp["w2"], kp["b2"],
               kp["w3"], kp["b3"], kp["w4"], kp["b4"])
    weight_bytes = sum(a.size * a.dtype.itemsize for a in weights)
    flops = 2 * B * (F * 256 + 256 * 128 + 128 * 128 + 128 * 128)

    if B <= single_call_max_b:
        # Tiny batch: launch/DMA-latency bound. Single invocation, everything
        # VMEM-resident, f32 output (avoids half-packed bf16 sublane tiles at B=8).
        # TODO(synk): could pack the 4 tiny bias DMAs into one operand; sub-us win.
        cost = pl.CostEstimate(
            flops=flops, transcendentals=0,
            bytes_accessed=x.size * x.dtype.itemsize + weight_bytes + B * 128 * 4)
        out = pl.pallas_call(
            mlp_kernel,
            out_shape=jax.ShapeDtypeStruct((B, 128), jnp.float32),
            in_specs=[pl.BlockSpec(memory_space=pltpu.MemorySpace.VMEM)]
                     * (1 + len(weights)),
            out_specs=pl.BlockSpec(memory_space=pltpu.MemorySpace.VMEM),
            cost_estimate=cost,
        )(x, *weights)
        return out[:, :n_out]

    # Large batch: 1-D parallel grid over batch tiles.  tm chosen so there are
    # always >=2 grid steps (v7x: shards across both TensorCores), capped at 1024
    # rows (per-step overhead amortized, VMEM ~ few MiB).  Weights stay resident
    # (constant index_map) while x / out tiles are double-buffered; last tile may
    # be partial (reads padded, stores masked).
    tm = min(max_tile, _round_up(pl.cdiv(B, 2), 128))
    grid = (pl.cdiv(B, tm),)

    cost = pl.CostEstimate(
        flops=flops, transcendentals=0,
        bytes_accessed=x.size * x.dtype.itemsize + weight_bytes + B * 128 * 2)

    def resident(shape):
        return pl.BlockSpec(shape, lambda i: (0, 0))

    out = pl.pallas_call(
        mlp_kernel,
        out_shape=jax.ShapeDtypeStruct((B, 128), jnp.bfloat16),
        grid=grid,
        in_specs=[
            pl.BlockSpec((tm, F), lambda i: (i, 0)),     # raw f32 x, full last dim
            resident(kp["w1"].shape), resident(kp["b1"].shape),
            resident(kp["w2"].shape), resident(kp["b2"].shape),
            resident(kp["w3"].shape), resident(kp["b3"].shape),
            resident(kp["w4"].shape), resident(kp["b4"].shape),
        ],
        out_specs=pl.BlockSpec((tm, 128), lambda i: (i, 0)),
        compiler_params=pltpu.CompilerParams(
            dimension_semantics=("parallel",),
            vmem_limit_bytes=32 * 1024 * 1024,
        ),
        cost_estimate=cost,
    )(x, *weights)

    return out[:, :n_out].astype(jnp.float32)


# ---------------------------------------------------------------------------
# Synthetic parameters matching nn.Linear / nn.BatchNorm1d shapes (eval mode).
# ---------------------------------------------------------------------------
def init_params(key, input_size):
    ks = jax.random.split(key, 12)
    eps = 1e-5

    def lin(kw, kb, fan_in, fan_out):
        bound = 1.0 / jnp.sqrt(fan_in)
        w = jax.random.uniform(kw, (fan_in, fan_out), jnp.float32, -bound, bound)
        b = jax.random.uniform(kb, (1, fan_out), jnp.float32, -bound, bound)
        return w, b

    w1, b1 = lin(ks[0], ks[1], input_size, 256)
    w2, b2 = lin(ks[2], ks[3], 256, 128)
    w3, b3 = lin(ks[4], ks[5], 128, 64)
    w4, b4 = lin(ks[6], ks[7], 64, 2)

    def bn_fold(kg, kb, n):
        gamma = 1.0 + 0.1 * jax.random.normal(kg, (1, n), jnp.float32)
        beta = 0.1 * jax.random.normal(kb, (1, n), jnp.float32)
        running_mean = 0.05 * jnp.arange(n, dtype=jnp.float32).reshape(1, n) / n
        running_var = jnp.ones((1, n), jnp.float32) * 1.2
        scale = gamma / jnp.sqrt(running_var + eps)
        shift = beta - running_mean * scale
        return scale, shift

    bn1_scale, bn1_shift = bn_fold(ks[8], ks[9], 256)
    bn2_scale, bn2_shift = bn_fold(ks[10], ks[11], 128)

    return {
        "w1": w1, "b1": b1, "bn1_scale": bn1_scale, "bn1_shift": bn1_shift,
        "w2": w2, "b2": b2, "bn2_scale": bn2_scale, "bn2_shift": bn2_shift,
        "w3": w3, "b3": b3,
        "w4": w4, "b4": b4,
    }


def reference_forward(x, p):
    """Full-precision JAX reference with the original (unfolded, unpadded) params."""
    h = jnp.maximum(x @ p["w1"] + p["b1"], 0.0) * p["bn1_scale"] + p["bn1_shift"]
    h = jnp.maximum(h @ p["w2"] + p["b2"], 0.0) * p["bn2_scale"] + p["bn2_shift"]
    h = jnp.maximum(h @ p["w3"] + p["b3"], 0.0)
    return h @ p["w4"] + p["b4"]


if __name__ == "__main__":
    key = jax.random.PRNGKey(0)
    k_x1, k_x2, k_p = jax.random.split(key, 3)

    INPUT_SIZE = 160  # small EEG-feature-vector-like shape
    params = init_params(k_p, INPUT_SIZE)
    kernel_params = fold_and_pack(params)

    # --- Tiny-batch path (single invocation) ---------------------------------
    B_small = 8
    x_small = jax.random.normal(k_x1, (B_small, INPUT_SIZE), jnp.float32)
    logits_small = mlp_classifier_forward(x_small, kernel_params)
    jax.block_until_ready(logits_small)
    ref_small = reference_forward(x_small, params)
    assert logits_small.shape == (B_small, 2)
    err_small = float(jnp.max(jnp.abs(logits_small - ref_small)))
    # bf16 weights/activations (f32 accumulation) -> loosened tolerance vs f32.
    assert err_small < 3e-2, f"small-batch mismatch: max abs err {err_small}"

    # --- Grid path (>=2 parallel steps, partial last tile, bf16 out) ---------
    B_large = 300
    x_large = jax.random.normal(k_x2, (B_large, INPUT_SIZE), jnp.float32)
    logits_large = mlp_classifier_forward(x_large, kernel_params)
    jax.block_until_ready(logits_large)
    ref_large = reference_forward(x_large, params)
    assert logits_large.shape == (B_large, 2)
    err_large = float(jnp.max(jnp.abs(logits_large - ref_large)))
    assert err_large < 3e-2, f"grid-path mismatch: max abs err {err_large}"

    print("KERNEL_OK")
</pallas_src>

<mosaic_0001>
module attributes {stable_mosaic.version = 11 : i64} {
  func.func @mlp_kernel(%arg0: memref<8x160xf32, #tpu.memory_space<vmem>>, %arg1: memref<160x256xbf16, #tpu.memory_space<vmem>>, %arg2: memref<1x256xf32, #tpu.memory_space<vmem>>, %arg3: memref<256x128xbf16, #tpu.memory_space<vmem>>, %arg4: memref<1x128xf32, #tpu.memory_space<vmem>>, %arg5: memref<128x128xbf16, #tpu.memory_space<vmem>>, %arg6: memref<1x128xf32, #tpu.memory_space<vmem>>, %arg7: memref<128x128xbf16, #tpu.memory_space<vmem>>, %arg8: memref<1x128xf32, #tpu.memory_space<vmem>>, %arg9: memref<8x128xf32, #tpu.memory_space<vmem>>) attributes {dimension_semantics = [], scalar_prefetch = 0 : i64, scratch_operands = 0 : i64, tpu.core_type = #tpu.core_type<tc>} {
    %c0 = arith.constant 0 : index
    %c0_0 = arith.constant 0 : index
    %0 = vector.load %arg0[%c0, %c0_0] : memref<8x160xf32, #tpu.memory_space<vmem>>, vector<8x160xf32>
    %1 = arith.truncf %0 : vector<8x160xf32> to vector<8x160xbf16>
    %c0_1 = arith.constant 0 : index
    %c0_2 = arith.constant 0 : index
    %2 = vector.load %arg1[%c0_1, %c0_2] : memref<160x256xbf16, #tpu.memory_space<vmem>>, vector<160x256xbf16>
    %cst = arith.constant dense<0.000000e+00> : vector<8x256xf32>
    %3 = tpu.matmul %1, %2, %cst {dimension_numbers = #tpu.dot_dimension_numbers<[1], [0], [0], [1], [0, 0, 1, 1], [], []>} : vector<8x160xbf16>, vector<160x256xbf16>, vector<8x256xf32> -> vector<8x256xf32>
    %c0_3 = arith.constant 0 : index
    %c0_4 = arith.constant 0 : index
    %4 = vector.load %arg2[%c0_3, %c0_4] : memref<1x256xf32, #tpu.memory_space<vmem>>, vector<1x256xf32>
    %5 = vector.broadcast %4 : vector<1x256xf32> to vector<8x256xf32>
    %6 = arith.addf %3, %5 : vector<8x256xf32>
    %cst_5 = arith.constant 0.000000e+00 : f32
    %7 = vector.broadcast %cst_5 : f32 to vector<8x256xf32>
    %8 = arith.maximumf %6, %7 : vector<8x256xf32>
    %9 = arith.truncf %8 : vector<8x256xf32> to vector<8x256xbf16>
    %c0_6 = arith.constant 0 : index
    %c0_7 = arith.constant 0 : index
    %10 = vector.load %arg3[%c0_6, %c0_7] : memref<256x128xbf16, #tpu.memory_space<vmem>>, vector<256x128xbf16>
    %cst_8 = arith.constant dense<0.000000e+00> : vector<8x128xf32>
    %11 = tpu.matmul %9, %10, %cst_8 {dimension_numbers = #tpu.dot_dimension_numbers<[1], [0], [0], [1], [0, 0, 1, 1], [], []>} : vector<8x256xbf16>, vector<256x128xbf16>, vector<8x128xf32> -> vector<8x128xf32>
    %c0_9 = arith.constant 0 : index
    %c0_10 = arith.constant 0 : index
    %12 = vector.load %arg4[%c0_9, %c0_10] : memref<1x128xf32, #tpu.memory_space<vmem>>, vector<1x128xf32>
    %13 = vector.broadcast %12 : vector<1x128xf32> to vector<8x128xf32>
    %14 = arith.addf %11, %13 : vector<8x128xf32>
    %cst_11 = arith.constant 0.000000e+00 : f32
    %15 = vector.broadcast %cst_11 : f32 to vector<8x128xf32>
    %16 = arith.maximumf %14, %15 : vector<8x128xf32>
    %17 = arith.truncf %16 : vector<8x128xf32> to vector<8x128xbf16>
    %c0_12 = arith.constant 0 : index
    %c0_13 = arith.constant 0 : index
    %18 = vector.load %arg5[%c0_12, %c0_13] : memref<128x128xbf16, #tpu.memory_space<vmem>>, vector<128x128xbf16>
    %cst_14 = arith.constant dense<0.000000e+00> : vector<8x128xf32>
    %19 = tpu.matmul %17, %18, %cst_14 {dimension_numbers = #tpu.dot_dimension_numbers<[1], [0], [0], [1], [0, 0, 1, 1], [], []>} : vector<8x128xbf16>, vector<128x128xbf16>, vector<8x128xf32> -> vector<8x128xf32>
    %c0_15 = arith.constant 0 : index
    %c0_16 = arith.constant 0 : index
    %20 = vector.load %arg6[%c0_15, %c0_16] : memref<1x128xf32, #tpu.memory_space<vmem>>, vector<1x128xf32>
    %21 = vector.broadcast %20 : vector<1x128xf32> to vector<8x128xf32>
    %22 = arith.addf %19, %21 : vector<8x128xf32>
    %cst_17 = arith.constant 0.000000e+00 : f32
    %23 = vector.broadcast %cst_17 : f32 to vector<8x128xf32>
    %24 = arith.maximumf %22, %23 : vector<8x128xf32>
    %25 = arith.truncf %24 : vector<8x128xf32> to vector<8x128xbf16>
    %c0_18 = arith.constant 0 : index
    %c0_19 = arith.constant 0 : index
    %26 = vector.load %arg7[%c0_18, %c0_19] : memref<128x128xbf16, #tpu.memory_space<vmem>>, vector<128x128xbf16>
    %cst_20 = arith.constant dense<0.000000e+00> : vector<8x128xf32>
    %27 = tpu.matmul %25, %26, %cst_20 {dimension_numbers = #tpu.dot_dimension_numbers<[1], [0], [0], [1], [0, 0, 1, 1], [], []>} : vector<8x128xbf16>, vector<128x128xbf16>, vector<8x128xf32> -> vector<8x128xf32>
    %c0_21 = arith.constant 0 : index
    %c0_22 = arith.constant 0 : index
    %28 = vector.load %arg8[%c0_21, %c0_22] : memref<1x128xf32, #tpu.memory_space<vmem>>, vector<1x128xf32>
    %29 = vector.broadcast %28 : vector<1x128xf32> to vector<8x128xf32>
    %30 = arith.addf %27, %29 : vector<8x128xf32>
    %c0_23 = arith.constant 0 : index
    %c0_24 = arith.constant 0 : index
    %31 = vector.load %arg9[%c0_23, %c0_24] : memref<8x128xf32, #tpu.memory_space<vmem>>, vector<8x128xf32>
    tpu.vector_store %arg9[%c0_23, %c0_24], %30 {strides = array<i32>} : memref<8x128xf32, #tpu.memory_space<vmem>>, vector<8x128xf32>,
    return
  }
}

</mosaic_0001>

<llo_original>
// kernel: tpu_custom_call.1
$region0: #{tpu_custom_call.1}
  #allocation0 [shape = 'u32[]', space=smem, size = 0x4, offset = 0x4, fixed_abs, tag = 'smem constant byte address 0x4 - core index']
  #allocation1 [shape = 'u32[144,128]{1,0:T(1,128)}', space=vmem, size = 0x12000, scoped, tag = 'internal scratch']
  %s0 = inlined_call_operand.hbm [shape: f32[8,160], index: 0, kind: input, shape index: {}]
  %s1 = inlined_call_operand.hbm [shape: bf16[160,256], index: 1, kind: input, shape index: {}]
  %s2 = inlined_call_operand.vmem [shape: f32[1,256], index: 2, kind: input, shape index: {}]
  %s3 = inlined_call_operand.hbm [shape: bf16[256,128], index: 3, kind: input, shape index: {}]
  %s4 = inlined_call_operand.vmem [shape: f32[1,128], index: 4, kind: input, shape index: {}]
  %s5 = inlined_call_operand.hbm [shape: bf16[128,128], index: 5, kind: input, shape index: {}]
  %s6 = inlined_call_operand.vmem [shape: f32[1,128], index: 6, kind: input, shape index: {}]
  %s7 = inlined_call_operand.hbm [shape: bf16[128,128], index: 7, kind: input, shape index: {}]
  %s8 = inlined_call_operand.vmem [shape: f32[1,128], index: 8, kind: input, shape index: {}]
  %s9 = inlined_call_operand.hbm [shape: f32[8,128], index: 9, kind: output, shape index: {}]
  %s10 = sld [smem:[#allocation0]]
  $region66: #{tpu_custom_call.1} parent=0
    _
  %s12 = ssub.s32 1, %s10
  %s13 = scalar_select 0, %s12, %s10
  $region1: #{tpu_custom_call.1} parent=0
    #allocation2 [shape = 'u8[8192]{0}', space=vmem, size = 0x2000, scoped, tag = 'input window, operand 0, single buffered']
    #allocation3 [shape = 's32[1]{0}', space=sflag, size = 0x4, scoped, tag = 'scoped memory for tpu_custom_call.1']
    #allocation4 [shape = 's32[1]{0}', space=sflag, size = 0x4, scoped, tag = 'scoped memory for tpu_custom_call.1']
    #allocation5 [shape = 'u8[81920]{0}', space=vmem, size = 0x14000, scoped, tag = 'input window, operand 1, single buffered']
    #allocation6 [shape = 's32[1]{0}', space=sflag, size = 0x4, scoped, tag = 'scoped memory for tpu_custom_call.1']
    #allocation7 [shape = 'u8[65536]{0}', space=vmem, size = 0x10000, scoped, tag = 'input window, operand 3, single buffered']
    #allocation8 [shape = 'u8[32768]{0}', space=vmem, size = 0x8000, scoped, tag = 'input window, operand 5, single buffered']
    #allocation9 [shape = 's32[1]{0}', space=sflag, size = 0x4, scoped, tag = 'scoped memory for tpu_custom_call.1']
    #allocation10 [shape = 'u8[32768]{0}', space=vmem, size = 0x8000, scoped, tag = 'input window, operand 7, single buffered']
    #allocation11 [shape = 'u8[4096]{0}', space=vmem, size = 0x1000, scoped, tag = 'output window, operand 0, single buffered']
    %14 = vsyncpa [#allocation3], 0
    %15 = vsyncpa [#allocation6], 0
    %16 = vsyncpa [#allocation9], 0
    %17 = vsyncpa [#allocation4], 0
    // Predicated region
    $region2: #{tpu_custom_call.1} parent=1 // pred_check
      _
    $region3: #{tpu_custom_call.1} parent=1 // pred_check_branch
      %19 = sbr.rel (0) target = $region5
    $region4: #{tpu_custom_call.1} parent=1 // pred_region
      %s21 = ssub.s32 256, 256
      %22 = vsyncadd [#allocation3], %s21
      %s24 = sshll.u32 [#allocation2], 4
      %s25 = int_to_ptr.vmem [resolvable:$true] %s24
      %27 = dma.hbm_to_vmem [thread:$0]  %s0, 256, %s25, [#allocation3]
    $region5: #{tpu_custom_call.1} parent=1 // pred_fallthru
      _
    // Predicated region
    $region6: #{tpu_custom_call.1} parent=1 // pred_check
      _
    $region7: #{tpu_custom_call.1} parent=1 // pred_check_branch
      %29 = sbr.rel (0) target = $region9
    $region8: #{tpu_custom_call.1} parent=1 // pred_region
      %s31 = ssub.s32 2560, 2560
      %32 = vsyncadd [#allocation6], %s31
      %s33 = sshll.u32 [#allocation5], 4
      %s34 = int_to_ptr.vmem [resolvable:$true] %s33
      %39 = dma.hbm_to_vmem [thread:$0]  %s1, 2560, %s34, [#allocation6], 128, 128, 8
    $region9: #{tpu_custom_call.1} parent=1 // pred_fallthru
      _
    // Predicated region
    $region10: #{tpu_custom_call.1} parent=1 // pred_check
      _
    $region11: #{tpu_custom_call.1} parent=1 // pred_check_branch
      %41 = sbr.rel (0) target = $region13
    $region12: #{tpu_custom_call.1} parent=1 // pred_region
      _
    $region13: #{tpu_custom_call.1} parent=1 // pred_fallthru
      _
    // Predicated region
    $region14: #{tpu_custom_call.1} parent=1 // pred_check
      _
    $region15: #{tpu_custom_call.1} parent=1 // pred_check_branch
      %43 = sbr.rel (0) target = $region17
    $region16: #{tpu_custom_call.1} parent=1 // pred_region
      %s45 = ssub.s32 2048, 2048
      %46 = vsyncadd [#allocation6], %s45
      %s47 = sshll.u32 [#allocation7], 4
      %s48 = int_to_ptr.vmem [resolvable:$true] %s47
      %53 = dma.hbm_to_vmem [thread:$0]  %s3, 2048, %s48, [#allocation6], 64, 64, 4
    $region17: #{tpu_custom_call.1} parent=1 // pred_fallthru
      _
    // Predicated region
    $region18: #{tpu_custom_call.1} parent=1 // pred_check
      _
    $region19: #{tpu_custom_call.1} parent=1 // pred_check_branch
      %55 = sbr.rel (0) target = $region21
    $region20: #{tpu_custom_call.1} parent=1 // pred_region
      _
    $region21: #{tpu_custom_call.1} parent=1 // pred_fallthru
      _
    // Predicated region
    $region22: #{tpu_custom_call.1} parent=1 // pred_check
      _
    $region23: #{tpu_custom_call.1} parent=1 // pred_check_branch
      %57 = sbr.rel (0) target = $region25
    $region24: #{tpu_custom_call.1} parent=1 // pred_region
      %s59 = ssub.s32 1024, 1024
      %60 = vsyncadd [#allocation9], %s59
      %s61 = sshll.u32 [#allocation8], 4
      %s62 = int_to_ptr.vmem [resolvable:$true] %s61
      %67 = dma.hbm_to_vmem [thread:$0]  %s5, 1024, %s62, [#allocation9], 64, 64, 4
    $region25: #{tpu_custom_call.1} parent=1 // pred_fallthru
      _
    // Predicated region
    $region26: #{tpu_custom_call.1} parent=1 // pred_check
      _
    $region27: #{tpu_custom_call.1} parent=1 // pred_check_branch
      %69 = sbr.rel (0) target = $region29
    $region28: #{tpu_custom_call.1} parent=1 // pred_region
      _
    $region29: #{tpu_custom_call.1} parent=1 // pred_fallthru
      _
    // Predicated region
    $region30: #{tpu_custom_call.1} parent=1 // pred_check
      _
    $region31: #{tpu_custom_call.1} parent=1 // pred_check_branch
      %71 = sbr.rel (0) target = $region33
    $region32: #{tpu_custom_call.1} parent=1 // pred_region
      %s73 = ssub.s32 1024, 1024
      %74 = vsyncadd [#allocation9], %s73
      %s75 = sshll.u32 [#allocation10], 4
      %s76 = int_to_ptr.vmem [resolvable:$true] %s75
      %81 = dma.hbm_to_vmem [thread:$0]  %s7, 1024, %s76, [#allocation9], 64, 64, 4
    $region33: #{tpu_custom_call.1} parent=1 // pred_fallthru
      _
    // Predicated region
    $region34: #{tpu_custom_call.1} parent=1 // pred_check
      _
    $region35: #{tpu_custom_call.1} parent=1 // pred_check_branch
      %83 = sbr.rel (0) target = $region37
    $region36: #{tpu_custom_call.1} parent=1 // pred_region
      _
    $region37: #{tpu_custom_call.1} parent=1 // pred_fallthru
      _
    // Predicated region
    $region38: #{tpu_custom_call.1} parent=1 // pred_check
      _
    $region39: #{tpu_custom_call.1} parent=1 // pred_check_branch
      %85 = sbr.rel (0) target = $region41
    $region40: #{tpu_custom_call.1} parent=1 // pred_region
      %86 = dma.done [#allocation3], 256
    $region41: #{tpu_custom_call.1} parent=1 // pred_fallthru
      _
    // Predicated region
    $region42: #{tpu_custom_call.1} parent=1 // pred_check
      _
    $region43: #{tpu_custom_call.1} parent=1 // pred_check_branch
      %88 = sbr.rel (0) target = $region45
    $region44: #{tpu_custom_call.1} parent=1 // pred_region
      %89 = dma.done [#allocation6], 2560
    $region45: #{tpu_custom_call.1} parent=1 // pred_fallthru
      _
    // Predicated region
    $region46: #{tpu_custom_call.1} parent=1 // pred_check
      _
    $region47: #{tpu_custom_call.1} parent=1 // pred_check_branch
      %91 = sbr.rel (0) target = $region49
    $region48: #{tpu_custom_call.1} parent=1 // pred_region
      %92 = dma.done [#allocation6], 2048
    $region49: #{tpu_custom_call.1} parent=1 // pred_fallthru
      _
    // Predicated region
    $region50: #{tpu_custom_call.1} parent=1 // pred_check
      _
    $region51: #{tpu_custom_call.1} parent=1 // pred_check_branch
      %94 = sbr.rel (0) target = $region53
    $region52: #{tpu_custom_call.1} parent=1 // pred_region
      %95 = dma.done [#allocation9], 1024
    $region53: #{tpu_custom_call.1} parent=1 // pred_fallthru
      _
    // Predicated region
    $region54: #{tpu_custom_call.1} parent=1 // pred_check
      _
    $region55: #{tpu_custom_call.1} parent=1 // pred_check_branch
      %97 = sbr.rel (0) target = $region57
    $region56: #{tpu_custom_call.1} parent=1 // pred_region
      %98 = dma.done [#allocation9], 1024
    $region57: #{tpu_custom_call.1} parent=1 // pred_fallthru
      _
    %v100 = vld [vmem:[#allocation2] sm:$0xff]
    %v101 = vld [vmem:[#allocation2 + $0x8] sm:$0xff]
    %v102 = vpack.c.bf16 %v100, %v100
    %v103 = vpack.c.bf16 %v101, %v101
    %v104 = vld [vmem:[#allocation5] sm:$0xff]
    %v105 = vld [vmem:[#allocation5 + $0x8] sm:$0xff]
    %v106 = vld [vmem:[#allocation5 + $0x10] sm:$0xff]
    %v107 = vld [vmem:[#allocation5 + $0x18] sm:$0xff]
    %v108 = vld [vmem:[#allocation5 + $0x20] sm:$0xff]
    %v109 = vld [vmem:[#allocation5 + $0x28] sm:$0xff]
    %v110 = vld [vmem:[#allocation5 + $0x30] sm:$0xff]
    %v111 = vld [vmem:[#allocation5 + $0x38] sm:$0xff]
    %v112 = vld [vmem:[#allocation5 + $0x40] sm:$0xff]
    %v113 = vld [vmem:[#allocation5 + $0x48] sm:$0xff]
    %v114 = vld [vmem:[#allocation5 + $0x50] sm:$0xff]
    %v115 = vld [vmem:[#allocation5 + $0x58] sm:$0xff]
    %v116 = vld [vmem:[#allocation5 + $0x60] sm:$0xff]
    %v117 = vld [vmem:[#allocation5 + $0x68] sm:$0xff]
    %v118 = vld [vmem:[#allocation5 + $0x70] sm:$0xff]
    %v119 = vld [vmem:[#allocation5 + $0x78] sm:$0xff]
    %v120 = vld [vmem:[#allocation5 + $0x80] sm:$0xff]
    %v121 = vld [vmem:[#allocation5 + $0x88] sm:$0xff]
    %v122 = vld [vmem:[#allocation5 + $0x90] sm:$0xff]
    %v123 = vld [vmem:[#allocation5 + $0x98] sm:$0xff]
    %v124 = vld [vmem:[%s2] sm:$0x3]
    %v126 = vlaneseq
    %v127 = vshrl.u32 %v126, 7
    %v128 = vsub.s32 0, %v127
    %v129 = vrot.slane %v124, %v128
    %v130 = vlaneseq
    %v131 = vshrl.u32 %v130, 7
    %v132 = vsub.s32 1, %v131
    %v133 = vrot.slane %v124, %v132
    %v156 = vunpack.c.l.b16 %v104
    %v157 = vunpack.c.h.b16 %v104
    %v158 = vunpack.c.l.b16 %v105
    %v159 = vunpack.c.h.b16 %v105
    %v160 = vunpack.c.l.b16 %v106
    %v161 = vunpack.c.h.b16 %v106
    %v162 = vunpack.c.l.b16 %v107
    %v163 = vunpack.c.h.b16 %v107
    %v164 = vunpack.c.l.b16 %v108
    %v165 = vunpack.c.h.b16 %v108
    %v166 = vunpack.c.l.b16 %v109
    %v167 = vunpack.c.h.b16 %v109
    %v168 = vunpack.c.l.b16 %v110
    %v169 = vunpack.c.h.b16 %v110
    %v170 = vunpack.c.l.b16 %v111
    %v171 = vunpack.c.h.b16 %v111
    %v172 = vunpack.c.l.b16 %v112
    %v173 = vunpack.c.h.b16 %v112
    %v174 = vunpack.c.l.b16 %v113
    %v175 = vunpack.c.h.b16 %v113
    %v176 = vunpack.c.l.b16 %v114
    %v177 = vunpack.c.h.b16 %v114
    %v178 = vunpack.c.l.b16 %v115
    %v179 = vunpack.c.h.b16 %v115
    %v180 = vunpack.c.l.b16 %v116
    %v181 = vunpack.c.h.b16 %v116
    %v182 = vunpack.c.l.b16 %v117
    %v183 = vunpack.c.h.b16 %v117
    %v184 = vunpack.c.l.b16 %v118
    %v185 = vunpack.c.h.b16 %v118
    %v186 = vunpack.c.l.b16 %v119
    %v187 = vunpack.c.h.b16 %v119
    %v188 = vunpack.c.l.b16 %v120
    %v189 = vunpack.c.h.b16 %v120
    %v190 = vunpack.c.l.b16 %v121
    %v191 = vunpack.c.h.b16 %v121
    %v192 = vunpack.c.l.b16 %v122
    %v193 = vunpack.c.h.b16 %v122
    %v194 = vunpack.c.l.b16 %v123
    %v195 = vunpack.c.h.b16 %v123
    %v196 = vpack.c.b16 %v158, %v156
    %v197 = vpack.c.b16 %v159, %v157
    %v198 = vpack.c.b16 %v162, %v160
    %v199 = vpack.c.b16 %v163, %v161
    %v200 = vpack.c.b16 %v166, %v164
    %v201 = vpack.c.b16 %v167, %v165
    %v202 = vpack.c.b16 %v170, %v168
    %v203 = vpack.c.b16 %v171, %v169
    %v204 = vpack.c.b16 %v174, %v172
    %v205 = vpack.c.b16 %v175, %v173
    %v206 = vpack.c.b16 %v178, %v176
    %v207 = vpack.c.b16 %v179, %v177
    %v208 = vpack.c.b16 %v182, %v180
    %v209 = vpack.c.b16 %v183, %v181
    %v210 = vpack.c.b16 %v186, %v184
    %v211 = vpack.c.b16 %v187, %v185
    %v212 = vpack.c.b16 %v190, %v188
    %v213 = vpack.c.b16 %v191, %v189
    %v214 = vpack.c.b16 %v194, %v192
    %v215 = vpack.c.b16 %v195, %v193
    %vm236 = vcmask 261120
    %v238 = vsel %vm236, %v103, 0
    %240 = vmatprep.subr.bf16.mxu0 %v211
    %241 = vmatpush1.bf16.msra.mxu0 %v210
    %242 = vmatprep.subr.bf16.mxu0 %v209
    %243 = vmatpush1.bf16.msra.mxu0 %v208
    %244 = vmatprep.subr.bf16.mxu0 %v207
    %245 = vmatpush1.bf16.msra.mxu0 %v206
    %246 = vmatprep.subr.bf16.mxu0 %v205
    %247 = vmatpush1.bf16.msra.mxu0 %v204
    %248 = vmatprep.subr.bf16.mxu0 %v203
    %249 = vmatpush1.bf16.msra.mxu0 %v202
    %250 = vmatprep.subr.bf16.mxu0 %v201
    %251 = vmatpush1.bf16.msra.mxu0 %v200
    %252 = vmatprep.subr.bf16.mxu0 %v199
    %253 = vmatpush1.bf16.msra.mxu0 %v198
    %254 = vmatprep.subr.bf16.mxu0 %v197
    %255 = vmatpush1.bf16.msra.mxu0 %v196
    %256 = vmatprep.subr.bf16.mxu0 0
    %257 = vmatpush2.bf16.msra.mxu0 0
    %258 = vmatprep.subr.bf16.mxu0 0
    %259 = vmatpush2.bf16.msra.mxu0 0
    %260 = vmatprep.subr.bf16.mxu0 0
    %261 = vmatpush2.bf16.msra.mxu0 0
    %262 = vmatprep.subr.bf16.mxu0 0
    %263 = vmatpush2.bf16.msra.mxu0 0
    %264 = vmatprep.subr.bf16.mxu0 0
    %265 = vmatpush2.bf16.msra.mxu0 0
    %266 = vmatprep.subr.bf16.mxu0 0
    %267 = vmatpush2.bf16.msra.mxu0 0
    %268 = vmatprep.subr.bf16.mxu0 %v215
    %269 = vmatpush2.bf16.msra.mxu0 %v214
    %270 = vmatprep.subr.bf16.mxu0 %v213
    %271 = vmatpush2.bf16.msra.mxu0 %v212
    %272 = vmatprep.mubr.bf16.mxu0 %v238
    %273 = vmatmul.mubr.bf16.gmra.mxu0 %v102
    %v274 = vpop.f32.mrf.mxu0
    %v275 = vadd.f32 %v129, %v274
    %v276 = vpop.f32.mrf.mxu0
    %v277 = vadd.f32 %v133, %v276
    %v278 = vpop.f32.mrf.mxu0
    %v279 = vpop.f32.mrf.mxu0
    %280 = vdwg.mxu0
    %v281 = vmax.f32 %v275, 0.0
    %v282 = vmax.f32 %v277, 0.0
    %v283 = vpack.c.bf16 %v281, %v281
    %v284 = vpack.c.bf16 %v282, %v282
    %v285 = vld [vmem:[#allocation7] sm:$0xf]
    %v286 = vld [vmem:[#allocation7 + $0x4] sm:$0xf]
    %v287 = vld [vmem:[#allocation7 + $0x8] sm:$0xf]
    %v288 = vld [vmem:[#allocation7 + $0xc] sm:$0xf]
    %v289 = vld [vmem:[#allocation7 + $0x10] sm:$0xf]
    %v290 = vld [vmem:[#allocation7 + $0x14] sm:$0xf]
    %v291 = vld [vmem:[#allocation7 + $0x18] sm:$0xf]
    %v292 = vld [vmem:[#allocation7 + $0x1c] sm:$0xf]
    %v293 = vld [vmem:[#allocation7 + $0x20] sm:$0xf]
    %v294 = vld [vmem:[#allocation7 + $0x24] sm:$0xf]
    %v295 = vld [vmem:[#allocation7 + $0x28] sm:$0xf]
    %v296 = vld [vmem:[#allocation7 + $0x2c] sm:$0xf]
    %v297 = vld [vmem:[#allocation7 + $0x30] sm:$0xf]
    %v298 = vld [vmem:[#allocation7 + $0x34] sm:$0xf]
    %v299 = vld [vmem:[#allocation7 + $0x38] sm:$0xf]
    %v300 = vld [vmem:[#allocation7 + $0x3c] sm:$0xf]
    %v301 = vld [vmem:[#allocation7 + $0x40] sm:$0xf]
    %v302 = vld [vmem:[#allocation7 + $0x44] sm:$0xf]
    %v303 = vld [vmem:[#allocation7 + $0x48] sm:$0xf]
    %v304 = vld [vmem:[#allocation7 + $0x4c] sm:$0xf]
    %v305 = vld [vmem:[#allocation7 + $0x50] sm:$0xf]
    %v306 = vld [vmem:[#allocation7 + $0x54] sm:$0xf]
    %v307 = vld [vmem:[#allocation7 + $0x58] sm:$0xf]
    %v308 = vld [vmem:[#allocation7 + $0x5c] sm:$0xf]
    %v309 = vld [vmem:[#allocation7 + $0x60] sm:$0xf]
    %v310 = vld [vmem:[#allocation7 + $0x64] sm:$0xf]
    %v311 = vld [vmem:[#allocation7 + $0x68] sm:$0xf]
    %v312 = vld [vmem:[#allocation7 + $0x6c] sm:$0xf]
    %v313 = vld [vmem:[#allocation7 + $0x70] sm:$0xf]
    %v314 = vld [vmem:[#allocation7 + $0x74] sm:$0xf]
    %v315 = vld [vmem:[#allocation7 + $0x78] sm:$0xf]
    %v316 = vld [vmem:[#allocation7 + $0x7c] sm:$0xf]
    %v317 = vld [vmem:[%s4] sm:$0x1]
    %v319 = vlaneseq
    %v320 = vshrl.u32 %v319, 7
    %v321 = vsub.s32 0, %v320
    %v322 = vrot.slane %v317, %v321
    %v356 = vunpack.c.l.b16 %v285
    %v357 = vunpack.c.l.b16 %v286
    %v358 = vunpack.c.l.b16 %v287
    %v359 = vunpack.c.l.b16 %v288
    %v360 = vunpack.c.l.b16 %v289
    %v361 = vunpack.c.l.b16 %v290
    %v362 = vunpack.c.l.b16 %v291
    %v363 = vunpack.c.l.b16 %v292
    %v364 = vunpack.c.l.b16 %v293
    %v365 = vunpack.c.l.b16 %v294
    %v366 = vunpack.c.l.b16 %v295
    %v367 = vunpack.c.l.b16 %v296
    %v368 = vunpack.c.l.b16 %v297
    %v369 = vunpack.c.l.b16 %v298
    %v370 = vunpack.c.l.b16 %v299
    %v371 = vunpack.c.l.b16 %v300
    %v372 = vunpack.c.l.b16 %v301
    %v373 = vunpack.c.l.b16 %v302
    %v374 = vunpack.c.l.b16 %v303
    %v375 = vunpack.c.l.b16 %v304
    %v376 = vunpack.c.l.b16 %v305
    %v377 = vunpack.c.l.b16 %v306
    %v378 = vunpack.c.l.b16 %v307
    %v379 = vunpack.c.l.b16 %v308
    %v380 = vunpack.c.l.b16 %v309
    %v381 = vunpack.c.l.b16 %v310
    %v382 = vunpack.c.l.b16 %v311
    %v383 = vunpack.c.l.b16 %v312
    %v384 = vunpack.c.l.b16 %v313
    %v385 = vunpack.c.l.b16 %v314
    %v386 = vunpack.c.l.b16 %v315
    %v387 = vunpack.c.l.b16 %v316
    %v388 = vpack.c.b16 %v357, %v356
    %v389 = vpack.c.b16 %v359, %v358
    %v390 = vpack.c.b16 %v361, %v360
    %v391 = vpack.c.b16 %v363, %v362
    %v392 = vpack.c.b16 %v365, %v364
    %v393 = vpack.c.b16 %v367, %v366
    %v394 = vpack.c.b16 %v369, %v368
    %v395 = vpack.c.b16 %v371, %v370
    %v396 = vpack.c.b16 %v373, %v372
    %v397 = vpack.c.b16 %v375, %v374
    %v398 = vpack.c.b16 %v377, %v376
    %v399 = vpack.c.b16 %v379, %v378
    %v400 = vpack.c.b16 %v381, %v380
    %v401 = vpack.c.b16 %v383, %v382
    %v402 = vpack.c.b16 %v385, %v384
    %v403 = vpack.c.b16 %v387, %v386
    %420 = vmatprep.subr.bf16.mxu0 0
    %421 = vmatpush1.bf16.msra.mxu0 %v395
    %422 = vmatprep.subr.bf16.mxu0 0
    %423 = vmatpush1.bf16.msra.mxu0 %v394
    %424 = vmatprep.subr.bf16.mxu0 0
    %425 = vmatpush1.bf16.msra.mxu0 %v393
    %426 = vmatprep.subr.bf16.mxu0 0
    %427 = vmatpush1.bf16.msra.mxu0 %v392
    %428 = vmatprep.subr.bf16.mxu0 0
    %429 = vmatpush1.bf16.msra.mxu0 %v391
    %430 = vmatprep.subr.bf16.mxu0 0
    %431 = vmatpush1.bf16.msra.mxu0 %v390
    %432 = vmatprep.subr.bf16.mxu0 0
    %433 = vmatpush1.bf16.msra.mxu0 %v389
    %434 = vmatprep.subr.bf16.mxu0 0
    %435 = vmatpush1.bf16.msra.mxu0 %v388
    %436 = vmatprep.subr.bf16.mxu0 0
    %437 = vmatpush2.bf16.msra.mxu0 %v403
    %438 = vmatprep.subr.bf16.mxu0 0
    %439 = vmatpush2.bf16.msra.mxu0 %v402
    %440 = vmatprep.subr.bf16.mxu0 0
    %441 = vmatpush2.bf16.msra.mxu0 %v401
    %442 = vmatprep.subr.bf16.mxu0 0
    %443 = vmatpush2.bf16.msra.mxu0 %v400
    %444 = vmatprep.subr.bf16.mxu0 0
    %445 = vmatpush2.bf16.msra.mxu0 %v399
    %446 = vmatprep.subr.bf16.mxu0 0
    %447 = vmatpush2.bf16.msra.mxu0 %v398
    %448 = vmatprep.subr.bf16.mxu0 0
    %449 = vmatpush2.bf16.msra.mxu0 %v397
    %450 = vmatprep.subr.bf16.mxu0 0
    %451 = vmatpush2.bf16.msra.mxu0 %v396
    %452 = vmatprep.mubr.bf16.mxu0 %v284
    %453 = vmatmul.mubr.bf16.gmra.mxu0 %v283
    %v454 = vpop.f32.mrf.mxu0
    %v455 = vadd.f32 %v322, %v454
    %v456 = vpop.f32.mrf.mxu0
    %v457 = vpop.f32.mrf.mxu0
    %v458 = vpop.f32.mrf.mxu0
    %459 = vdwg.mxu0
    %v460 = vmax.f32 %v455, 0.0
    %v461 = vpack.c.bf16 %v460, %v460
    %v462 = vld [vmem:[#allocation8] sm:$0xf]
    %v463 = vld [vmem:[#allocation8 + $0x4] sm:$0xf]
    %v464 = vld [vmem:[#allocation8 + $0x8] sm:$0xf]
    %v465 = vld [vmem:[#allocation8 + $0xc] sm:$0xf]
    %v466 = vld [vmem:[#allocation8 + $0x10] sm:$0xf]
    %v467 = vld [vmem:[#allocation8 + $0x14] sm:$0xf]
    %v468 = vld [vmem:[#allocation8 + $0x18] sm:$0xf]
    %v469 = vld [vmem:[#allocation8 + $0x1c] sm:$0xf]
    %v470 = vld [vmem:[#allocation8 + $0x20] sm:$0xf]
    %v471 = vld [vmem:[#allocation8 + $0x24] sm:$0xf]
    %v472 = vld [vmem:[#allocation8 + $0x28] sm:$0xf]
    %v473 = vld [vmem:[#allocation8 + $0x2c] sm:$0xf]
    %v474 = vld [vmem:[#allocation8 + $0x30] sm:$0xf]
    %v475 = vld [vmem:[#allocation8 + $0x34] sm:$0xf]
    %v476 = vld [vmem:[#allocation8 + $0x38] sm:$0xf]
    %v477 = vld [vmem:[#allocation8 + $0x3c] sm:$0xf]
    %v478 = vld [vmem:[%s6] sm:$0x1]
    %v480 = vlaneseq
    %v481 = vshrl.u32 %v480, 7
    %v482 = vsub.s32 0, %v481
    %v483 = vrot.slane %v478, %v482
    %v501 = vunpack.c.l.b16 %v462
    %v502 = vunpack.c.l.b16 %v463
    %v503 = vunpack.c.l.b16 %v464
    %v504 = vunpack.c.l.b16 %v465
    %v505 = vunpack.c.l.b16 %v466
    %v506 = vunpack.c.l.b16 %v467
    %v507 = vunpack.c.l.b16 %v468
    %v508 = vunpack.c.l.b16 %v469
    %v509 = vunpack.c.l.b16 %v470
    %v510 = vunpack.c.l.b16 %v471
    %v511 = vunpack.c.l.b16 %v472
    %v512 = vunpack.c.l.b16 %v473
    %v513 = vunpack.c.l.b16 %v474
    %v514 = vunpack.c.l.b16 %v475
    %v515 = vunpack.c.l.b16 %v476
    %v516 = vunpack.c.l.b16 %v477
    %v517 = vpack.c.b16 %v502, %v501
    %v518 = vpack.c.b16 %v504, %v503
    %v519 = vpack.c.b16 %v506, %v505
    %v520 = vpack.c.b16 %v508, %v507
    %v521 = vpack.c.b16 %v510, %v509
    %v522 = vpack.c.b16 %v512, %v511
    %v523 = vpack.c.b16 %v514, %v513
    %v524 = vpack.c.b16 %v516, %v515
    %533 = vmatprep.subr.bf16.mxu0 0
    %534 = vmatpush1.bf16.msra.mxu0 %v524
    %535 = vmatprep.subr.bf16.mxu0 0
    %536 = vmatpush1.bf16.msra.mxu0 %v523
    %537 = vmatprep.subr.bf16.mxu0 0
    %538 = vmatpush1.bf16.msra.mxu0 %v522
    %539 = vmatprep.subr.bf16.mxu0 0
    %540 = vmatpush1.bf16.msra.mxu0 %v521
    %541 = vmatprep.subr.bf16.mxu0 0
    %542 = vmatpush1.bf16.msra.mxu0 %v520
    %543 = vmatprep.subr.bf16.mxu0 0
    %544 = vmatpush1.bf16.msra.mxu0 %v519
    %545 = vmatprep.subr.bf16.mxu0 0
    %546 = vmatpush1.bf16.msra.mxu0 %v518
    %547 = vmatprep.subr.bf16.mxu0 0
    %548 = vmatpush1.bf16.msra.mxu0 %v517
    %549 = vmatprep.subr.bf16.mxu0 0
    %550 = vmatpush2.bf16.msra.mxu0 0
    %551 = vmatprep.subr.bf16.mxu0 0
    %552 = vmatpush2.bf16.msra.mxu0 0
    %553 = vmatprep.subr.bf16.mxu0 0
    %554 = vmatpush2.bf16.msra.mxu0 0
    %555 = vmatprep.subr.bf16.mxu0 0
    %556 = vmatpush2.bf16.msra.mxu0 0
    %557 = vmatprep.subr.bf16.mxu0 0
    %558 = vmatpush2.bf16.msra.mxu0 0
    %559 = vmatprep.subr.bf16.mxu0 0
    %560 = vmatpush2.bf16.msra.mxu0 0
    %561 = vmatprep.subr.bf16.mxu0 0
    %562 = vmatpush2.bf16.msra.mxu0 0
    %563 = vmatprep.subr.bf16.mxu0 0
    %564 = vmatpush2.bf16.msra.mxu0 0
    %565 = vmatprep.mubr.bf16.mxu0 0
    %566 = vmatmul.mubr.bf16.gmra.mxu0 %v461
    %v567 = vpop.f32.mrf.mxu0
    %v568 = vadd.f32 %v483, %v567
    %v569 = vpop.f32.mrf.mxu0
    %v570 = vpop.f32.mrf.mxu0
    %v571 = vpop.f32.mrf.mxu0
    %572 = vdwg.mxu0
    %v573 = vmax.f32 %v568, 0.0
    %v574 = vpack.c.bf16 %v573, %v573
    %v575 = vld [vmem:[#allocation10] sm:$0xf]
    %v576 = vld [vmem:[#allocation10 + $0x4] sm:$0xf]
    %v577 = vld [vmem:[#allocation10 + $0x8] sm:$0xf]
    %v578 = vld [vmem:[#allocation10 + $0xc] sm:$0xf]
    %v579 = vld [vmem:[#allocation10 + $0x10] sm:$0xf]
    %v580 = vld [vmem:[#allocation10 + $0x14] sm:$0xf]
    %v581 = vld [vmem:[#allocation10 + $0x18] sm:$0xf]
    %v582 = vld [vmem:[#allocation10 + $0x1c] sm:$0xf]
    %v583 = vld [vmem:[#allocation10 + $0x20] sm:$0xf]
    %v584 = vld [vmem:[#allocation10 + $0x24] sm:$0xf]
    %v585 = vld [vmem:[#allocation10 + $0x28] sm:$0xf]
    %v586 = vld [vmem:[#allocation10 + $0x2c] sm:$0xf]
    %v587 = vld [vmem:[#allocation10 + $0x30] sm:$0xf]
    %v588 = vld [vmem:[#allocation10 + $0x34] sm:$0xf]
    %v589 = vld [vmem:[#allocation10 + $0x38] sm:$0xf]
    %v590 = vld [vmem:[#allocation10 + $0x3c] sm:$0xf]
    %v591 = vld [vmem:[%s8] sm:$0x1]
    %v593 = vlaneseq
    %v594 = vshrl.u32 %v593, 7
    %v595 = vsub.s32 0, %v594
    %v596 = vrot.slane %v591, %v595
    %v614 = vunpack.c.l.b16 %v575
    %v615 = vunpack.c.l.b16 %v576
    %v616 = vunpack.c.l.b16 %v577
    %v617 = vunpack.c.l.b16 %v578
    %v618 = vunpack.c.l.b16 %v579
    %v619 = vunpack.c.l.b16 %v580
    %v620 = vunpack.c.l.b16 %v581
    %v621 = vunpack.c.l.b16 %v582
    %v622 = vunpack.c.l.b16 %v583
    %v623 = vunpack.c.l.b16 %v584
    %v624 = vunpack.c.l.b16 %v585
    %v625 = vunpack.c.l.b16 %v586
    %v626 = vunpack.c.l.b16 %v587
    %v627 = vunpack.c.l.b16 %v588
    %v628 = vunpack.c.l.b16 %v589
    %v629 = vunpack.c.l.b16 %v590
    %v630 = vpack.c.b16 %v615, %v614
    %v631 = vpack.c.b16 %v617, %v616
    %v632 = vpack.c.b16 %v619, %v618
    %v633 = vpack.c.b16 %v621, %v620
    %v634 = vpack.c.b16 %v623, %v622
    %v635 = vpack.c.b16 %v625, %v624
    %v636 = vpack.c.b16 %v627, %v626
    %v637 = vpack.c.b16 %v629, %v628
    %646 = vmatprep.subr.bf16.mxu0 0
    %647 = vmatpush1.bf16.msra.mxu0 %v637
    %648 = vmatprep.subr.bf16.mxu0 0
    %649 = vmatpush1.bf16.msra.mxu0 %v636
    %650 = vmatprep.subr.bf16.mxu0 0
    %651 = vmatpush1.bf16.msra.mxu0 %v635
    %652 = vmatprep.subr.bf16.mxu0 0
    %653 = vmatpush1.bf16.msra.mxu0 %v634
    %654 = vmatprep.subr.bf16.mxu0 0
    %655 = vmatpush1.bf16.msra.mxu0 %v633
    %656 = vmatprep.subr.bf16.mxu0 0
    %657 = vmatpush1.bf16.msra.mxu0 %v632
    %658 = vmatprep.subr.bf16.mxu0 0
    %659 = vmatpush1.bf16.msra.mxu0 %v631
    %660 = vmatprep.subr.bf16.mxu0 0
    %661 = vmatpush1.bf16.msra.mxu0 %v630
    %662 = vmatprep.subr.bf16.mxu0 0
    %663 = vmatpush2.bf16.msra.mxu0 0
    %664 = vmatprep.subr.bf16.mxu0 0
    %665 = vmatpush2.bf16.msra.mxu0 0
    %666 = vmatprep.subr.bf16.mxu0 0
    %667 = vmatpush2.bf16.msra.mxu0 0
    %668 = vmatprep.subr.bf16.mxu0 0
    %669 = vmatpush2.bf16.msra.mxu0 0
    %670 = vmatprep.subr.bf16.mxu0 0
    %671 = vmatpush2.bf16.msra.mxu0 0
    %672 = vmatprep.subr.bf16.mxu0 0
    %673 = vmatpush2.bf16.msra.mxu0 0
    %674 = vmatprep.subr.bf16.mxu0 0
    %675 = vmatpush2.bf16.msra.mxu0 0
    %676 = vmatprep.subr.bf16.mxu0 0
    %677 = vmatpush2.bf16.msra.mxu0 0
    %678 = vmatprep.mubr.bf16.mxu0 0
    %679 = vmatmul.mubr.bf16.gmra.mxu0 %v574
    %v680 = vpop.f32.mrf.mxu0
    %v681 = vadd.f32 %v596, %v680
    %v682 = vpop.f32.mrf.mxu0
    %v683 = vpop.f32.mrf.mxu0
    %v684 = vpop.f32.mrf.mxu0
    %685 = vdwg.mxu0
    %686 = vst [vmem:[#allocation11] sm:$0xff] %v681
    // Predicated region
    $region58: #{tpu_custom_call.1} parent=1 // pred_check
      _
    $region59: #{tpu_custom_call.1} parent=1 // pred_check_branch
      %688 = sbr.rel (0) target = $region61
    $region60: #{tpu_custom_call.1} parent=1 // pred_region
      %s690 = ssub.s32 128, 128
      %691 = vsyncadd [#allocation4], %s690
      %s693 = sshll.u32 [#allocation11], 4
      %s694 = int_to_ptr.vmem [resolvable:$true] %s693
      %696 = dma.vmem_to_hbm [thread:$0]  %s694, 128, %s9, [#allocation4]
    $region61: #{tpu_custom_call.1} parent=1 // pred_fallthru
      _
    // Predicated region
    $region62: #{tpu_custom_call.1} parent=1 // pred_check
      _
    $region63: #{tpu_custom_call.1} parent=1 // pred_check_branch
      %698 = sbr.rel (0) target = $region65
    $region64: #{tpu_custom_call.1} parent=1 // pred_region
      %699 = dma.done [#allocation4], 128
    $region65: #{tpu_custom_call.1} parent=1 // pred_fallthru
      _
    %700 = vsyncpa [#allocation3], 1
    %701 = vsyncpa [#allocation6], 1
    %702 = vsyncpa [#allocation9], 1
    %703 = vsyncpa [#allocation4], 1

</llo_original>
